<compile_context>
chip_gen: v7x
topology: tpu7x:2x2x1
jax: 0.10.0
libtpu: 0.0.40
codegen_flags: <defaults>
</compile_context>

<pallas_src>
import functools

import jax
import jax.numpy as jnp
from jax.experimental import pallas as pl
from jax.experimental.pallas import tpu as pltpu

EPS = 1e-5


# ----------------------------------------------------------------------------- helpers
def _round_up(n, m):
    return ((n + m - 1) // m) * m


def _cdiv(a, b):
    return -(-a // b)


def _vmem_capacity_bytes():
    try:
        return int(pltpu.get_tpu_info().vmem_capacity_bytes)
    except Exception:
        return 64 << 20  # v7x per-TensorCore VMEM (smallest in the fleet)


def _choose_tiling(rows, d_model, d_ff, x_itemsize, ff_tile=None):
    """Pick (row_tile, ff_tile, vmem_limit_bytes) for the post-attention kernel."""
    vmem = _vmem_capacity_bytes()
    limit = int(vmem * 3 // 4)          # what we actually grant via vmem_limit_bytes
    budget = limit - (2 << 20)          # headroom for compiler-internal scratch

    def cost(rt, tff):
        n_ff = _cdiv(d_ff, tff)
        wbuf = 1 if n_ff == 1 else 2             # Buffered(1) when weights are resident
        weights = wbuf * 2 * 2 * d_model * tff   # w1 + w2 chunks, bf16
        consts = 8 * (d_ff + 4 * d_model)        # biases + LN params (generous)
        per_row = 2 * 2 * d_model * x_itemsize   # r in + out, double-buffered
        per_row += 2 * 4 * d_model               # x1 + acc f32 scratch
        per_row += 6 * tff + 12 * d_model        # in-kernel f32/bf16 temporaries
        return weights + consts + rt * per_row

    # d_ff chunk candidates: full width first, then lane-aligned exact divisors
    # (a ragged d_ff chunk would accumulate OOB garbage into valid outputs).
    if ff_tile is not None:
        assert d_ff % ff_tile == 0 and (ff_tile % 128 == 0 or ff_tile == d_ff)
        ff_cands = [ff_tile]
    else:
        ff_cands, f = [], d_ff
        while f >= 128 and d_ff % f == 0:
            ff_cands.append(f)
            if f % 2:
                break
            f //= 2
        if not ff_cands:
            ff_cands = [d_ff]

    # Row-tile candidates: multiples of 256 (also multiples of 128 for v5e),
    # targeting >= 512 rows per tile when VMEM allows.
    rows8 = _round_up(max(rows, 8), 8)
    row_cands = [t for t in (1024, 768, 512, 256) if t <= rows8] or [rows8]
    # Keep >= 2 grid steps over rows when there is enough work so megacore parts
    # (v7x: 2 TensorCores) can shard the "parallel" row axis.
    if rows8 >= 512:
        capped = [t for t in row_cands if _cdiv(rows8, t) >= 2]
        row_cands = capped or row_cands

    for rt in row_cands:                 # prefer the largest row tile that fits
        for tff in ff_cands:             # prefer resident (unchunked) weights
            if cost(rt, tff) <= budget:
                return rt, tff, limit
    return row_cands[-1], ff_cands[-1], limit


def _layernorm_f32(v, gamma, beta):
    # Two-pass mean/variance (matches nn.LayerNorm, avoids E[x^2]-mu^2 cancellation).
    mu = jnp.mean(v, axis=-1, keepdims=True)
    c = v - mu
    var = jnp.mean(c * c, axis=-1, keepdims=True)
    return c * jax.lax.rsqrt(var + EPS) * gamma + beta


# ----------------------------------------------------------------------------- kernel
def _encoder_post_attn_kernel(r_ref, w1_ref, b1_ref, w2_ref, b2_ref,
                              g1_ref, be1_ref, g2_ref, be2_ref,
                              o_ref, x1_ref, acc_ref, *, activation):
    # grid = (row tiles [parallel], d_ff chunks [arbitrary / reduction])
    j = pl.program_id(1)

    @pl.when(j == 0)
    def _():
        # residual 1 + norm1 in f32, kept resident in VMEM across the d_ff chunks.
        # TODO(synk): nn.Dropout is identity (inference); training-mode dropout would
        # need pltpu.prng_seed / prng_random_bits.
        r = r_ref[...].astype(jnp.float32)
        x1_ref[...] = _layernorm_f32(r,
                                     g1_ref[...].astype(jnp.float32),
                                     be1_ref[...].astype(jnp.float32))
        acc_ref[...] = jnp.zeros_like(acc_ref)

    # Position-wise FFN chunk: conv1d(kernel_size=1) == channel matmul on the MXU.
    # bf16 operands, f32 accumulation.
    x1_bf = x1_ref[...].astype(w1_ref.dtype)
    h = jnp.dot(x1_bf, w1_ref[...], preferred_element_type=jnp.float32)
    h = h + b1_ref[...].astype(jnp.float32)
    if activation == "relu":
        h = jnp.maximum(h, 0.0)
    else:
        h = jax.nn.gelu(h)
    acc_ref[...] += jnp.dot(h.astype(w2_ref.dtype), w2_ref[...],
                            preferred_element_type=jnp.float32)

    @pl.when(j == pl.num_programs(1) - 1)
    def _():
        y = acc_ref[...] + b2_ref[...].astype(jnp.float32)
        out = _layernorm_f32(x1_ref[...] + y,
                             g2_ref[...].astype(jnp.float32),
                             be2_ref[...].astype(jnp.float32))
        o_ref[...] = out.astype(o_ref.dtype)


# ----------------------------------------------------------------------------- wrapper
def _default_attention(x, attn_mask=None):
    # TODO(synk): `self.attention` is an injected nn.Module with its own learned
    # projections (not owned by EncoderLayer); a plain scaled dot-product
    # self-attention stands in for it here.  For realistic L this should itself be a
    # Pallas flash-attention kernel (it materializes B*L*L scores).
    d = x.shape[-1]
    xf = x.astype(jnp.float32)
    scores = jnp.einsum("bld,bmd->blm", xf, xf) / jnp.sqrt(jnp.float32(d))
    if attn_mask is not None:
        scores = jnp.where(attn_mask, -jnp.inf, scores)
    attn = jax.nn.softmax(scores, axis=-1)
    new_x = jnp.einsum("blm,bmd->bld", attn, xf).astype(x.dtype)
    return new_x, attn


def encoder_layer(x, params, *, attention_fn=None, activation="relu", ff_tile=None):
    """Forward of EncoderLayer.  x: (B, L, d_model).  Returns (out, attn)."""
    if attention_fn is None:
        attention_fn = _default_attention
    new_x, attn = attention_fn(x)
    # Fold residual-1 into the attention epilogue (under jit XLA fuses this add into
    # the attention output write) so the Pallas kernel reads ONE row input.
    B, L, d_model = x.shape
    r = (x + new_x).reshape(B * L, d_model)

    # Conv1d kernel_size=1 weights -> (in, out) matmul layout, cast once to bf16 for
    # the MXU.  (For production, pre-transform params once outside the jitted call.)
    w1t = params["conv1_w"][:, :, 0].T.astype(jnp.bfloat16)    # (d_model, d_ff)
    w2t = params["conv2_w"][:, :, 0].T.astype(jnp.bfloat16)    # (d_ff, d_model)
    d_ff = w1t.shape[1]
    bc1 = params["conv1_b"].reshape(1, d_ff).astype(jnp.float32)
    bc2 = params["conv2_b"].reshape(1, d_model).astype(jnp.float32)
    g1 = params["norm1_w"].reshape(1, d_model).astype(jnp.float32)
    be1 = params["norm1_b"].reshape(1, d_model).astype(jnp.float32)
    g2 = params["norm2_w"].reshape(1, d_model).astype(jnp.float32)
    be2 = params["norm2_b"].reshape(1, d_model).astype(jnp.float32)

    rows = B * L
    row_tile, tff, vmem_limit = _choose_tiling(
        rows, d_model, d_ff, jnp.dtype(x.dtype).itemsize, ff_tile)
    n_ff = d_ff // tff
    grid = (_cdiv(rows, row_tile), n_ff)    # ragged final row block; no jnp.pad copies

    row_spec = pl.BlockSpec((row_tile, d_model), lambda i, j: (i, 0))
    const = pl.Buffered(1)                  # single-buffer grid-invariant operands
    wmode = const if n_ff == 1 else None    # weights stream (double-buffer) when chunked

    def spec(shape, index_map, mode):
        if mode is None:
            return pl.BlockSpec(shape, index_map)
        return pl.BlockSpec(shape, index_map, pipeline_mode=mode)

    kernel = functools.partial(_encoder_post_attn_kernel, activation=activation)

    out2 = pl.pallas_call(
        kernel,
        out_shape=jax.ShapeDtypeStruct((rows, d_model), x.dtype),
        grid_spec=pltpu.PrefetchScalarGridSpec(
            num_scalar_prefetch=0,
            grid=grid,
            in_specs=[
                row_spec,                                             # r = x + new_x
                spec((d_model, tff), lambda i, j: (0, j), wmode),     # conv1 weight chunk
                spec((1, tff),       lambda i, j: (0, j), wmode),     # conv1 bias chunk
                spec((tff, d_model), lambda i, j: (j, 0), wmode),     # conv2 weight chunk
                spec((1, d_model),   lambda i, j: (0, 0), const),     # conv2 bias
                spec((1, d_model),   lambda i, j: (0, 0), const),     # norm1 gamma
                spec((1, d_model),   lambda i, j: (0, 0), const),     # norm1 beta
                spec((1, d_model),   lambda i, j: (0, 0), const),     # norm2 gamma
                spec((1, d_model),   lambda i, j: (0, 0), const),     # norm2 beta
            ],
            out_specs=row_spec,
            scratch_shapes=[
                pltpu.VMEM((row_tile, d_model), jnp.float32),   # x1 (post-norm1)
                pltpu.VMEM((row_tile, d_model), jnp.float32),   # FFN output accumulator
            ],
        ),
        compiler_params=pltpu.CompilerParams(
            dimension_semantics=("parallel", "arbitrary"),
            vmem_limit_bytes=vmem_limit,
        ),
    )(r, w1t, bc1, w2t, bc2, g1, be1, g2, be2)

    return out2.reshape(B, L, d_model), attn


# ----------------------------------------------------------------------------- reference
def _reference(x, params, *, attention_fn, activation="relu"):
    new_x, attn = attention_fn(x)
    r1 = (x + new_x).astype(jnp.float32)

    def ln(v, g, b):
        mu = jnp.mean(v, axis=-1, keepdims=True)
        var = jnp.mean((v - mu) ** 2, axis=-1, keepdims=True)
        return (v - mu) * jax.lax.rsqrt(var + EPS) * g + b

    x1 = ln(r1, params["norm1_w"], params["norm1_b"])
    w1 = params["conv1_w"][:, :, 0].astype(jnp.float32)     # (d_ff, d_model)
    w2 = params["conv2_w"][:, :, 0].astype(jnp.float32)     # (d_model, d_ff)
    hp = jax.lax.Precision.HIGHEST
    y = jnp.einsum("bld,fd->blf", x1, w1, precision=hp) + params["conv1_b"]
    y = jnp.maximum(y, 0.0) if activation == "relu" else jax.nn.gelu(y)
    y = jnp.einsum("blf,df->bld", y, w2, precision=hp) + params["conv2_b"]
    out = ln(x1 + y, params["norm2_w"], params["norm2_b"])
    return out.astype(x.dtype), attn


# ----------------------------------------------------------------------------- demo
if __name__ == "__main__":
    key = jax.random.PRNGKey(0)
    B, L, d_model = 2, 8, 32
    d_ff = 256

    ks = jax.random.split(key, 9)
    x = jax.random.normal(ks[0], (B, L, d_model), dtype=jnp.float32)
    params = {
        "conv1_w": 0.1 * jax.random.normal(ks[1], (d_ff, d_model, 1), jnp.float32),
        "conv1_b": 0.1 * jax.random.normal(ks[2], (d_ff,), jnp.float32),
        "conv2_w": 0.1 * jax.random.normal(ks[3], (d_model, d_ff, 1), jnp.float32),
        "conv2_b": 0.1 * jax.random.normal(ks[4], (d_model,), jnp.float32),
        "norm1_w": jnp.ones((d_model,), jnp.float32)
                   + 0.1 * jax.random.normal(ks[5], (d_model,), jnp.float32),
        "norm1_b": 0.1 * jax.random.normal(ks[6], (d_model,), jnp.float32),
        "norm2_w": jnp.ones((d_model,), jnp.float32)
                   + 0.1 * jax.random.normal(ks[7], (d_model,), jnp.float32),
        "norm2_b": 0.1 * jax.random.normal(ks[8], (d_model,), jnp.float32),
    }

    ref_out, ref_attn = _reference(x, params, attention_fn=_default_attention,
                                   activation="relu")

    # 1) auto tiling (weights resident, single d_ff chunk at these sizes)
    run = jax.jit(functools.partial(encoder_layer, activation="relu"))
    out, attn = run(x, params)
    out = jax.block_until_ready(out)
    assert out.shape == x.shape and out.dtype == x.dtype
    err = float(jnp.max(jnp.abs(out.astype(jnp.float32) - ref_out.astype(jnp.float32))))
    assert err < 5e-2, err  # bf16 weights/activations vs f32-HIGHEST reference

    # 2) forced d_ff chunking (exercises the accumulator / large-width v7x path)
    run_chunked = jax.jit(functools.partial(encoder_layer, activation="relu",
                                            ff_tile=128))
    out_c, _ = run_chunked(x, params)
    out_c = jax.block_until_ready(out_c)
    err_c = float(jnp.max(jnp.abs(out_c.astype(jnp.float32) - ref_out.astype(jnp.float32))))
    assert err_c < 5e-2, err_c

    print("KERNEL_OK")
</pallas_src>

<mosaic_0001>
module attributes {stable_mosaic.version = 11 : i64} {
  func.func @_encoder_post_attn_kernel(%arg0: i32, %arg1: i32, %arg2: memref<16x32xf32, #tpu.memory_space<vmem>>, %arg3: memref<32x256xbf16, #tpu.memory_space<vmem>>, %arg4: memref<1x256xf32, #tpu.memory_space<vmem>>, %arg5: memref<256x32xbf16, #tpu.memory_space<vmem>>, %arg6: memref<1x32xf32, #tpu.memory_space<vmem>>, %arg7: memref<1x32xf32, #tpu.memory_space<vmem>>, %arg8: memref<1x32xf32, #tpu.memory_space<vmem>>, %arg9: memref<1x32xf32, #tpu.memory_space<vmem>>, %arg10: memref<1x32xf32, #tpu.memory_space<vmem>>, %arg11: memref<16x32xf32, #tpu.memory_space<vmem>>, %arg12: memref<16x32xf32, #tpu.memory_space<vmem>>, %arg13: memref<16x32xf32, #tpu.memory_space<vmem>>) attributes {dimension_semantics = [#tpu.dimension_semantics<parallel>, #tpu.dimension_semantics<arbitrary>], iteration_bounds = array<i64: 1, 1>, scalar_prefetch = 0 : i64, scratch_operands = 2 : i64, tpu.core_type = #tpu.core_type<tc>, window_params = [{transform_indices = @transform_0, window_bounds = array<i64: 16, 32>}, {pipeline_mode = #tpu.pipeline_mode<synchronous>, transform_indices = @transform_1, window_bounds = array<i64: 32, 256>}, {pipeline_mode = #tpu.pipeline_mode<synchronous>, transform_indices = @transform_2, window_bounds = array<i64: 1, 256>}, {pipeline_mode = #tpu.pipeline_mode<synchronous>, transform_indices = @transform_3, window_bounds = array<i64: 256, 32>}, {pipeline_mode = #tpu.pipeline_mode<synchronous>, transform_indices = @transform_4, window_bounds = array<i64: 1, 32>}, {pipeline_mode = #tpu.pipeline_mode<synchronous>, transform_indices = @transform_5, window_bounds = array<i64: 1, 32>}, {pipeline_mode = #tpu.pipeline_mode<synchronous>, transform_indices = @transform_6, window_bounds = array<i64: 1, 32>}, {pipeline_mode = #tpu.pipeline_mode<synchronous>, transform_indices = @transform_7, window_bounds = array<i64: 1, 32>}, {pipeline_mode = #tpu.pipeline_mode<synchronous>, transform_indices = @transform_8, window_bounds = array<i64: 1, 32>}, {transform_indices = @transform_9, window_bounds = array<i64: 16, 32>}]} {
    %c0_i32 = arith.constant 0 : i32
    %0 = arith.cmpi eq, %arg1, %c0_i32 : i32
    %1 = arith.extui %0 : i1 to i32
    %c0_i32_0 = arith.constant 0 : i32
    %2 = arith.cmpi ne, %1, %c0_i32_0 : i32
    scf.if %2 {
      %c0_16 = arith.constant 0 : index
      %c0_17 = arith.constant 0 : index
      %21 = vector.load %arg2[%c0_16, %c0_17] : memref<16x32xf32, #tpu.memory_space<vmem>>, vector<16x32xf32>
      %c0_18 = arith.constant 0 : index
      %c0_19 = arith.constant 0 : index
      %22 = vector.load %arg7[%c0_18, %c0_19] : memref<1x32xf32, #tpu.memory_space<vmem>>, vector<1x32xf32>
      %c0_20 = arith.constant 0 : index
      %c0_21 = arith.constant 0 : index
      %23 = vector.load %arg8[%c0_20, %c0_21] : memref<1x32xf32, #tpu.memory_space<vmem>>, vector<1x32xf32>
      %cst_22 = arith.constant dense<0.000000e+00> : vector<16xf32>
      %24 = vector.multi_reduction <add>, %21, %cst_22 [1] : vector<16x32xf32> to vector<16xf32>
      %25 = vector.shape_cast %24 : vector<16xf32> to vector<16x1xf32>
      %cst_23 = arith.constant 3.200000e+01 : f32
      %26 = vector.broadcast %cst_23 : f32 to vector<16x1xf32>
      %27 = arith.divf %25, %26 : vector<16x1xf32>
      %28 = vector.broadcast %27 : vector<16x1xf32> to vector<16x32xf32>
      %29 = arith.subf %21, %28 : vector<16x32xf32>
      %30 = arith.mulf %29, %29 : vector<16x32xf32>
      %cst_24 = arith.constant dense<0.000000e+00> : vector<16xf32>
      %31 = vector.multi_reduction <add>, %30, %cst_24 [1] : vector<16x32xf32> to vector<16xf32>
      %32 = vector.shape_cast %31 : vector<16xf32> to vector<16x1xf32>
      %cst_25 = arith.constant 3.200000e+01 : f32
      %33 = vector.broadcast %cst_25 : f32 to vector<16x1xf32>
      %34 = arith.divf %32, %33 : vector<16x1xf32>
      %cst_26 = arith.constant 9.99999974E-6 : f32
      %35 = vector.broadcast %cst_26 : f32 to vector<16x1xf32>
      %36 = arith.addf %34, %35 : vector<16x1xf32>
      %37 = math.rsqrt %36 : vector<16x1xf32>
      %38 = vector.broadcast %37 : vector<16x1xf32> to vector<16x32xf32>
      %39 = arith.mulf %29, %38 : vector<16x32xf32>
      %40 = vector.broadcast %22 : vector<1x32xf32> to vector<16x32xf32>
      %41 = arith.mulf %39, %40 : vector<16x32xf32>
      %42 = vector.broadcast %23 : vector<1x32xf32> to vector<16x32xf32>
      %43 = arith.addf %41, %42 : vector<16x32xf32>
      %c0_27 = arith.constant 0 : index
      %c0_28 = arith.constant 0 : index
      %44 = vector.load %arg12[%c0_27, %c0_28] : memref<16x32xf32, #tpu.memory_space<vmem>>, vector<16x32xf32>
      tpu.vector_store %arg12[%c0_27, %c0_28], %43 {strides = array<i32>} : memref<16x32xf32, #tpu.memory_space<vmem>>, vector<16x32xf32>,
      %cst_29 = arith.constant 0.000000e+00 : f32
      %45 = vector.broadcast %cst_29 : f32 to vector<16x32xf32>
      %c0_30 = arith.constant 0 : index
      %c0_31 = arith.constant 0 : index
      %46 = vector.load %arg13[%c0_30, %c0_31] : memref<16x32xf32, #tpu.memory_space<vmem>>, vector<16x32xf32>
      tpu.vector_store %arg13[%c0_30, %c0_31], %45 {strides = array<i32>} : memref<16x32xf32, #tpu.memory_space<vmem>>, vector<16x32xf32>,
    } else {
    }
    %c0 = arith.constant 0 : index
    %c0_1 = arith.constant 0 : index
    %3 = vector.load %arg12[%c0, %c0_1] : memref<16x32xf32, #tpu.memory_space<vmem>>, vector<16x32xf32>
    %4 = arith.truncf %3 : vector<16x32xf32> to vector<16x32xbf16>
    %c0_2 = arith.constant 0 : index
    %c0_3 = arith.constant 0 : index
    %5 = vector.load %arg3[%c0_2, %c0_3] : memref<32x256xbf16, #tpu.memory_space<vmem>>, vector<32x256xbf16>
    %cst = arith.constant dense<0.000000e+00> : vector<16x256xf32>
    %6 = tpu.matmul %4, %5, %cst {dimension_numbers = #tpu.dot_dimension_numbers<[1], [0], [0], [1], [0, 0, 1, 1], [], []>} : vector<16x32xbf16>, vector<32x256xbf16>, vector<16x256xf32> -> vector<16x256xf32>
    %c0_4 = arith.constant 0 : index
    %c0_5 = arith.constant 0 : index
    %7 = vector.load %arg4[%c0_4, %c0_5] : memref<1x256xf32, #tpu.memory_space<vmem>>, vector<1x256xf32>
    %8 = vector.broadcast %7 : vector<1x256xf32> to vector<16x256xf32>
    %9 = arith.addf %6, %8 : vector<16x256xf32>
    %cst_6 = arith.constant 0.000000e+00 : f32
    %10 = vector.broadcast %cst_6 : f32 to vector<16x256xf32>
    %11 = arith.maximumf %9, %10 : vector<16x256xf32>
    %c0_7 = arith.constant 0 : index
    %c0_8 = arith.constant 0 : index
    %12 = vector.load %arg13[%c0_7, %c0_8] : memref<16x32xf32, #tpu.memory_space<vmem>>, vector<16x32xf32>
    %13 = arith.truncf %11 : vector<16x256xf32> to vector<16x256xbf16>
    %c0_9 = arith.constant 0 : index
    %c0_10 = arith.constant 0 : index
    %14 = vector.load %arg5[%c0_9, %c0_10] : memref<256x32xbf16, #tpu.memory_space<vmem>>, vector<256x32xbf16>
    %cst_11 = arith.constant dense<0.000000e+00> : vector<16x32xf32>
    %15 = tpu.matmul %13, %14, %cst_11 {dimension_numbers = #tpu.dot_dimension_numbers<[1], [0], [0], [1], [0, 0, 1, 1], [], []>} : vector<16x256xbf16>, vector<256x32xbf16>, vector<16x32xf32> -> vector<16x32xf32>
    %16 = arith.addf %12, %15 : vector<16x32xf32>
    %c0_12 = arith.constant 0 : index
    %c0_13 = arith.constant 0 : index
    %17 = vector.load %arg13[%c0_12, %c0_13] : memref<16x32xf32, #tpu.memory_space<vmem>>, vector<16x32xf32>
    tpu.vector_store %arg13[%c0_12, %c0_13], %16 {strides = array<i32>} : memref<16x32xf32, #tpu.memory_space<vmem>>, vector<16x32xf32>,
    %c0_i32_14 = arith.constant 0 : i32
    %18 = arith.cmpi eq, %arg1, %c0_i32_14 : i32
    %19 = arith.extui %18 : i1 to i32
    %c0_i32_15 = arith.constant 0 : i32
    %20 = arith.cmpi ne, %19, %c0_i32_15 : i32
    scf.if %20 {
      %c0_16 = arith.constant 0 : index
      %c0_17 = arith.constant 0 : index
      %21 = vector.load %arg13[%c0_16, %c0_17] : memref<16x32xf32, #tpu.memory_space<vmem>>, vector<16x32xf32>
      %c0_18 = arith.constant 0 : index
      %c0_19 = arith.constant 0 : index
      %22 = vector.load %arg6[%c0_18, %c0_19] : memref<1x32xf32, #tpu.memory_space<vmem>>, vector<1x32xf32>
      %23 = vector.broadcast %22 : vector<1x32xf32> to vector<16x32xf32>
      %24 = arith.addf %21, %23 : vector<16x32xf32>
      %c0_20 = arith.constant 0 : index
      %c0_21 = arith.constant 0 : index
      %25 = vector.load %arg12[%c0_20, %c0_21] : memref<16x32xf32, #tpu.memory_space<vmem>>, vector<16x32xf32>
      %26 = arith.addf %25, %24 : vector<16x32xf32>
      %c0_22 = arith.constant 0 : index
      %c0_23 = arith.constant 0 : index
      %27 = vector.load %arg9[%c0_22, %c0_23] : memref<1x32xf32, #tpu.memory_space<vmem>>, vector<1x32xf32>
      %c0_24 = arith.constant 0 : index
      %c0_25 = arith.constant 0 : index
      %28 = vector.load %arg10[%c0_24, %c0_25] : memref<1x32xf32, #tpu.memory_space<vmem>>, vector<1x32xf32>
      %cst_26 = arith.constant dense<0.000000e+00> : vector<16xf32>
      %29 = vector.multi_reduction <add>, %26, %cst_26 [1] : vector<16x32xf32> to vector<16xf32>
      %30 = vector.shape_cast %29 : vector<16xf32> to vector<16x1xf32>
      %cst_27 = arith.constant 3.200000e+01 : f32
      %31 = vector.broadcast %cst_27 : f32 to vector<16x1xf32>
      %32 = arith.divf %30, %31 : vector<16x1xf32>
      %33 = vector.broadcast %32 : vector<16x1xf32> to vector<16x32xf32>
      %34 = arith.subf %26, %33 : vector<16x32xf32>
      %35 = arith.mulf %34, %34 : vector<16x32xf32>
      %cst_28 = arith.constant dense<0.000000e+00> : vector<16xf32>
      %36 = vector.multi_reduction <add>, %35, %cst_28 [1] : vector<16x32xf32> to vector<16xf32>
      %37 = vector.shape_cast %36 : vector<16xf32> to vector<16x1xf32>
      %cst_29 = arith.constant 3.200000e+01 : f32
      %38 = vector.broadcast %cst_29 : f32 to vector<16x1xf32>
      %39 = arith.divf %37, %38 : vector<16x1xf32>
      %cst_30 = arith.constant 9.99999974E-6 : f32
      %40 = vector.broadcast %cst_30 : f32 to vector<16x1xf32>
      %41 = arith.addf %39, %40 : vector<16x1xf32>
      %42 = math.rsqrt %41 : vector<16x1xf32>
      %43 = vector.broadcast %42 : vector<16x1xf32> to vector<16x32xf32>
      %44 = arith.mulf %34, %43 : vector<16x32xf32>
      %45 = vector.broadcast %27 : vector<1x32xf32> to vector<16x32xf32>
      %46 = arith.mulf %44, %45 : vector<16x32xf32>
      %47 = vector.broadcast %28 : vector<1x32xf32> to vector<16x32xf32>
      %48 = arith.addf %46, %47 : vector<16x32xf32>
      %c0_31 = arith.constant 0 : index
      %c0_32 = arith.constant 0 : index
      %49 = vector.load %arg11[%c0_31, %c0_32] : memref<16x32xf32, #tpu.memory_space<vmem>>, vector<16x32xf32>
      tpu.vector_store %arg11[%c0_31, %c0_32], %48 {strides = array<i32>} : memref<16x32xf32, #tpu.memory_space<vmem>>, vector<16x32xf32>,
    } else {
    }
    return
  }
  func.func @transform_0(%arg0: i32, %arg1: i32) -> (i32, i32) {
    %c0_i32 = arith.constant 0 : i32
    %c0_i32_0 = arith.constant 0 : i32
    return %arg0, %c0_i32 : i32, i32
  }
  func.func @transform_1(%arg0: i32, %arg1: i32) -> (i32, i32) {
    %c0_i32 = arith.constant 0 : i32
    %c0_i32_0 = arith.constant 0 : i32
    return %c0_i32, %arg1 : i32, i32
  }
  func.func @transform_2(%arg0: i32, %arg1: i32) -> (i32, i32) {
    %c0_i32 = arith.constant 0 : i32
    %c0_i32_0 = arith.constant 0 : i32
    return %c0_i32, %arg1 : i32, i32
  }
  func.func @transform_3(%arg0: i32, %arg1: i32) -> (i32, i32) {
    %c0_i32 = arith.constant 0 : i32
    %c0_i32_0 = arith.constant 0 : i32
    return %arg1, %c0_i32 : i32, i32
  }
  func.func @transform_4(%arg0: i32, %arg1: i32) -> (i32, i32) {
    %c0_i32 = arith.constant 0 : i32
    %c0_i32_0 = arith.constant 0 : i32
    %c0_i32_1 = arith.constant 0 : i32
    return %c0_i32, %c0_i32_0 : i32, i32
  }
  func.func @transform_5(%arg0: i32, %arg1: i32) -> (i32, i32) {
    %c0_i32 = arith.constant 0 : i32
    %c0_i32_0 = arith.constant 0 : i32
    %c0_i32_1 = arith.constant 0 : i32
    return %c0_i32, %c0_i32_0 : i32, i32
  }
  func.func @transform_6(%arg0: i32, %arg1: i32) -> (i32, i32) {
    %c0_i32 = arith.constant 0 : i32
    %c0_i32_0 = arith.constant 0 : i32
    %c0_i32_1 = arith.constant 0 : i32
    return %c0_i32, %c0_i32_0 : i32, i32
  }
  func.func @transform_7(%arg0: i32, %arg1: i32) -> (i32, i32) {
    %c0_i32 = arith.constant 0 : i32
    %c0_i32_0 = arith.constant 0 : i32
    %c0_i32_1 = arith.constant 0 : i32
    return %c0_i32, %c0_i32_0 : i32, i32
  }
  func.func @transform_8(%arg0: i32, %arg1: i32) -> (i32, i32) {
    %c0_i32 = arith.constant 0 : i32
    %c0_i32_0 = arith.constant 0 : i32
    %c0_i32_1 = arith.constant 0 : i32
    return %c0_i32, %c0_i32_0 : i32, i32
  }
  func.func @transform_9(%arg0: i32, %arg1: i32) -> (i32, i32) {
    %c0_i32 = arith.constant 0 : i32
    %c0_i32_0 = arith.constant 0 : i32
    return %arg0, %c0_i32 : i32, i32
  }
}

</mosaic_0001>

<llo_original>
// kernel: encoder_layer.1
$region0: #{encoder_layer.1}
  #allocation0 [shape = 'u32[]', space=smem, size = 0x4, offset = 0x4, fixed_abs, tag = 'smem constant byte address 0x4 - core index']
  #allocation1 [shape = 'u32[144,128]{1,0:T(1,128)}', space=vmem, size = 0x12000, scoped, tag = 'internal scratch']
  #allocation2 [shape = 'f32[16,32]{1,0:T(8,128)}', space=vmem, size = 0x2000, scoped, tag = 'scratch operand']
  #allocation3 [shape = 'f32[16,32]{1,0:T(8,128)}', space=vmem, size = 0x2000, scoped, tag = 'scratch operand']
  %s0 = inlined_call_operand.vmem [shape: f32[16,32], index: 0, kind: input, shape index: {}]
  %s1 = inlined_call_operand.vmem [shape: bf16[32,256], index: 1, kind: input, shape index: {}]
  %s2 = inlined_call_operand.vmem [shape: f32[1,256], index: 2, kind: input, shape index: {}]
  %s3 = inlined_call_operand.vmem [shape: bf16[256,32], index: 3, kind: input, shape index: {}]
  %s4 = inlined_call_operand.vmem [shape: f32[1,32], index: 4, kind: input, shape index: {}]
  %s5 = inlined_call_operand.vmem [shape: f32[1,32], index: 5, kind: input, shape index: {}]
  %s6 = inlined_call_operand.vmem [shape: f32[1,32], index: 6, kind: input, shape index: {}]
  %s7 = inlined_call_operand.vmem [shape: f32[1,32], index: 7, kind: input, shape index: {}]
  %s8 = inlined_call_operand.vmem [shape: f32[1,32], index: 8, kind: input, shape index: {}]
  %s9 = inlined_call_operand.hbm [shape: f32[16,32], index: 9, kind: output, shape index: {}]
  %s10 = sld [smem:[#allocation0]]
  $region54: #{encoder_layer.1} parent=0
    _
  %s12 = ssub.s32 1, %s10
  %s13 = scalar_select 0, %s12, %s10
  $region1: #{encoder_layer.1} parent=0
    #allocation4 [shape = 'u8[8192]{0}', space=vmem, size = 0x2000, scoped, tag = 'output window, operand 0, single buffered']
    #allocation5 [shape = 's32[1]{0}', space=sflag, size = 0x4, scoped, tag = 'scoped memory for encoder_layer.1']
    %14 = vsyncpa [#allocation5], 0
    // Predicated region
    $region2: #{encoder_layer.1} parent=1 // pred_check
      _
    $region3: #{encoder_layer.1} parent=1 // pred_check_branch
      %16 = sbr.rel (0) target = $region5
    $region4: #{encoder_layer.1} parent=1 // pred_region
      _
    $region5: #{encoder_layer.1} parent=1 // pred_fallthru
      _
    // Predicated region
    $region6: #{encoder_layer.1} parent=1 // pred_check
      _
    $region7: #{encoder_layer.1} parent=1 // pred_check_branch
      %18 = sbr.rel (0) target = $region9
    $region8: #{encoder_layer.1} parent=1 // pred_region
      _
    $region9: #{encoder_layer.1} parent=1 // pred_fallthru
      _
    // Predicated region
    $region10: #{encoder_layer.1} parent=1 // pred_check
      _
    $region11: #{encoder_layer.1} parent=1 // pred_check_branch
      %20 = sbr.rel (0) target = $region13
    $region12: #{encoder_layer.1} parent=1 // pred_region
      _
    $region13: #{encoder_layer.1} parent=1 // pred_fallthru
      _
    // Predicated region
    $region14: #{encoder_layer.1} parent=1 // pred_check
      _
    $region15: #{encoder_layer.1} parent=1 // pred_check_branch
      %22 = sbr.rel (0) target = $region17
    $region16: #{encoder_layer.1} parent=1 // pred_region
      _
    $region17: #{encoder_layer.1} parent=1 // pred_fallthru
      _
    // Predicated region
    $region18: #{encoder_layer.1} parent=1 // pred_check
      _
    $region19: #{encoder_layer.1} parent=1 // pred_check_branch
      %24 = sbr.rel (0) target = $region21
    $region20: #{encoder_layer.1} parent=1 // pred_region
      _
    $region21: #{encoder_layer.1} parent=1 // pred_fallthru
      _
    // Predicated region
    $region22: #{encoder_layer.1} parent=1 // pred_check
      _
    $region23: #{encoder_layer.1} parent=1 // pred_check_branch
      %26 = sbr.rel (0) target = $region25
    $region24: #{encoder_layer.1} parent=1 // pred_region
      _
    $region25: #{encoder_layer.1} parent=1 // pred_fallthru
      _
    // Predicated region
    $region26: #{encoder_layer.1} parent=1 // pred_check
      _
    $region27: #{encoder_layer.1} parent=1 // pred_check_branch
      %28 = sbr.rel (0) target = $region29
    $region28: #{encoder_layer.1} parent=1 // pred_region
      _
    $region29: #{encoder_layer.1} parent=1 // pred_fallthru
      _
    // Predicated region
    $region30: #{encoder_layer.1} parent=1 // pred_check
      _
    $region31: #{encoder_layer.1} parent=1 // pred_check_branch
      %30 = sbr.rel (0) target = $region33
    $region32: #{encoder_layer.1} parent=1 // pred_region
      _
    $region33: #{encoder_layer.1} parent=1 // pred_fallthru
      _
    // Predicated region
    $region34: #{encoder_layer.1} parent=1 // pred_check
      _
    $region35: #{encoder_layer.1} parent=1 // pred_check_branch
      %32 = sbr.rel (0) target = $region37
    $region36: #{encoder_layer.1} parent=1 // pred_region
      _
    $region37: #{encoder_layer.1} parent=1 // pred_fallthru
      _
    %p34 = scmp.eq.s32.totalorder 0, 0
    // Predicated region
    $region38: #{encoder_layer.1} parent=1 // pred_check
      %p35 = pneg %p34
    $region39: #{encoder_layer.1} parent=1 // pred_check_branch
      %37 = sbr.rel (%p35) target = $region41
    $region40: #{encoder_layer.1} parent=1 // pred_region
      %v38 = vld [vmem:[%s0] sm:$0xff]
      %v39 = vld [vmem:[%s0 + $0x8] sm:$0xff]
      %v40 = vld [vmem:[%s5] sm:$0x1]
      %v41 = vld [vmem:[%s6] sm:$0x1]
      %vm42 = vcmask 261120
      %v43 = vsel %vm42, %v38, 0.0
      %44 = vadd.xlane.f32.xlu0 %v43
      %v45 = vpop.xlane.xlu0 %44
      %v46 = vsel %vm42, %v39, 0.0
      %47 = vadd.xlane.f32.xlu0 %v46
      %v48 = vpop.xlane.xlu0 %47
      %v49 = vrcp.pop 32.0
      %v50 = vmul.f32 %v45, %v49
      %v51 = vmul.f32 %v48, %v49
      %v52 = vsub.f32 %v38, %v50
      %v53 = vsub.f32 %v39, %v51
      %v54 = vmul.f32 %v52, %v52
      %v55 = vmul.f32 %v53, %v53
      %v56 = vsel %vm42, %v54, 0.0
      %57 = vadd.xlane.f32.xlu0 %v56
      %v58 = vpop.xlane.xlu0 %57
      %v59 = vsel %vm42, %v55, 0.0
      %60 = vadd.xlane.f32.xlu0 %v59
      %v61 = vpop.xlane.xlu0 %60
      %v62 = vmul.f32 %v58, %v49
      %v63 = vmul.f32 %v61, %v49
      %v64 = vadd.f32 %v62, 1e-05
      %v65 = vadd.f32 %v63, 1e-05
      %v66 = vrsqrt.pop %v64
      %v67 = vrsqrt.pop %v65
      %v68 = vmul.f32 %v52, %v66
      %v69 = vmul.f32 %v53, %v67
      %v71 = vlaneseq
      %v72 = vshrl.u32 %v71, 7
      %v73 = vsub.s32 0, %v72
      %v74 = vrot.slane %v40, %v73
      %v76 = vmul.f32 %v68, %v74
      %v77 = vmul.f32 %v69, %v74
      %v79 = vlaneseq
      %v80 = vshrl.u32 %v79, 7
      %v81 = vsub.s32 0, %v80
      %v82 = vrot.slane %v41, %v81
      %v84 = vadd.f32 %v76, %v82
      %v85 = vadd.f32 %v77, %v82
      %86 = vst.msk [vmem:[#allocation2] sm:$0xff] %vm42, %v84
      %87 = vst.msk [vmem:[#allocation2 + $0x8] sm:$0xff] %vm42, %v85
      %88 = vst.msk [vmem:[#allocation3] sm:$0xff] %vm42, 0.0
      %89 = vst.msk [vmem:[#allocation3 + $0x8] sm:$0xff] %vm42, 0.0
    $region41: #{encoder_layer.1} parent=1 // pred_fallthru
      _
    %v90 = vld [vmem:[#allocation2] sm:$0xff]
    %v91 = vld [vmem:[#allocation2 + $0x8] sm:$0xff]
    %v92 = vpack.c.bf16 %v91, %v90
    %v93 = vld [vmem:[%s1] sm:$0xff]
    %v94 = vld [vmem:[%s1 + $0x8] sm:$0xff]
    %v95 = vld [vmem:[%s1 + $0x10] sm:$0xff]
    %v96 = vld [vmem:[%s1 + $0x18] sm:$0xff]
    %v97 = vld [vmem:[%s2] sm:$0x3]
    %v99 = vlaneseq
    %v100 = vshrl.u32 %v99, 7
    %v101 = vsub.s32 0, %v100
    %v102 = vrot.slane %v97, %v101
    %v103 = vlaneseq
    %v104 = vshrl.u32 %v103, 7
    %v105 = vsub.s32 1, %v104
    %v106 = vrot.slane %v97, %v105
    %v113 = vunpack.c.l.b16 %v93
    %v114 = vunpack.c.h.b16 %v93
    %v115 = vunpack.c.l.b16 %v94
    %v116 = vunpack.c.h.b16 %v94
    %v117 = vunpack.c.l.b16 %v95
    %v118 = vunpack.c.h.b16 %v95
    %v119 = vunpack.c.l.b16 %v96
    %v120 = vunpack.c.h.b16 %v96
    %v121 = vpack.c.b16 %v115, %v113
    %v122 = vpack.c.b16 %v116, %v114
    %v123 = vpack.c.b16 %v119, %v117
    %v124 = vpack.c.b16 %v120, %v118
    %vm129 = vcmask 261120
    %v131 = vsel %vm129, %v92, 0
    %133 = vmatprep.subr.bf16.mxu0 %v122
    %134 = vmatpush1.bf16.msra.mxu0 %v121
    %135 = vmatprep.subr.bf16.mxu0 %v124
    %136 = vmatpush1.bf16.msra.mxu0 %v123
    %137 = vmatprep.subr.bf16.mxu0 0
    %138 = vmatpush1.bf16.msra.mxu0 0
    %139 = vmatprep.subr.bf16.mxu0 0
    %140 = vmatpush1.bf16.msra.mxu0 0
    %141 = vmatprep.subr.bf16.mxu0 0
    %142 = vmatpush1.bf16.msra.mxu0 0
    %143 = vmatprep.subr.bf16.mxu0 0
    %144 = vmatpush1.bf16.msra.mxu0 0
    %145 = vmatprep.subr.bf16.mxu0 0
    %146 = vmatpush1.bf16.msra.mxu0 0
    %147 = vmatprep.subr.bf16.mxu0 0
    %148 = vmatpush1.bf16.msra.mxu0 0
    %149 = vmatprep.subr.bf16.mxu0 0
    %150 = vmatpush1.bf16.msra.mxu0 0
    %151 = vmatprep.subr.bf16.mxu0 0
    %152 = vmatpush1.bf16.msra.mxu0 0
    %153 = vmatprep.subr.bf16.mxu0 0
    %154 = vmatpush1.bf16.msra.mxu0 0
    %155 = vmatprep.subr.bf16.mxu0 0
    %156 = vmatpush1.bf16.msra.mxu0 0
    %157 = vmatprep.subr.bf16.mxu0 0
    %158 = vmatpush1.bf16.msra.mxu0 0
    %159 = vmatprep.subr.bf16.mxu0 0
    %160 = vmatpush1.bf16.msra.mxu0 0
    %161 = vmatprep.subr.bf16.mxu0 0
    %162 = vmatpush1.bf16.msra.mxu0 0
    %163 = vmatprep.subr.bf16.mxu0 0
    %164 = vmatpush1.bf16.msra.mxu0 0
    %165 = vmatprep.mubr.bf16.mxu0 0
    %166 = vmatmul.mubr.bf16.gmra.mrb[0].mxu0 %v131
    %v167 = vpop.f32.mrb[0].mxu0
    %v168 = vadd.f32 %v102, %v167
    %v169 = vpop.f32.mrb[0].mxu0
    %v170 = vadd.f32 %v106, %v169
    %v171 = vpop.f32.mrb[0].mxu0
    %v172 = vadd.f32 %v102, %v171
    %v173 = vpop.f32.mrb[0].mxu0
    %v174 = vadd.f32 %v106, %v173
    %175 = vdwg.mxu0
    %v176 = vmax.f32 %v168, 0.0
    %v177 = vmax.f32 %v170, 0.0
    %v178 = vmax.f32 %v172, 0.0
    %v179 = vmax.f32 %v174, 0.0
    %v180 = vld [vmem:[#allocation3] sm:$0xff]
    %v181 = vld [vmem:[#allocation3 + $0x8] sm:$0xff]
    %v182 = vpack.c.bf16 %v178, %v176
    %v183 = vpack.c.bf16 %v179, %v177
    %v184 = vld [vmem:[%s3] sm:$0xf]
    %v185 = vld [vmem:[%s3 + $0x4] sm:$0xf]
    %v186 = vld [vmem:[%s3 + $0x8] sm:$0xf]
    %v187 = vld [vmem:[%s3 + $0xc] sm:$0xf]
    %v188 = vld [vmem:[%s3 + $0x10] sm:$0xf]
    %v189 = vld [vmem:[%s3 + $0x14] sm:$0xf]
    %v190 = vld [vmem:[%s3 + $0x18] sm:$0xf]
    %v191 = vld [vmem:[%s3 + $0x1c] sm:$0xf]
    %v192 = vld [vmem:[%s3 + $0x20] sm:$0xf]
    %v193 = vld [vmem:[%s3 + $0x24] sm:$0xf]
    %v194 = vld [vmem:[%s3 + $0x28] sm:$0xf]
    %v195 = vld [vmem:[%s3 + $0x2c] sm:$0xf]
    %v196 = vld [vmem:[%s3 + $0x30] sm:$0xf]
    %v197 = vld [vmem:[%s3 + $0x34] sm:$0xf]
    %v198 = vld [vmem:[%s3 + $0x38] sm:$0xf]
    %v199 = vld [vmem:[%s3 + $0x3c] sm:$0xf]
    %v200 = vld [vmem:[%s3 + $0x40] sm:$0xf]
    %v201 = vld [vmem:[%s3 + $0x44] sm:$0xf]
    %v202 = vld [vmem:[%s3 + $0x48] sm:$0xf]
    %v203 = vld [vmem:[%s3 + $0x4c] sm:$0xf]
    %v204 = vld [vmem:[%s3 + $0x50] sm:$0xf]
    %v205 = vld [vmem:[%s3 + $0x54] sm:$0xf]
    %v206 = vld [vmem:[%s3 + $0x58] sm:$0xf]
    %v207 = vld [vmem:[%s3 + $0x5c] sm:$0xf]
    %v208 = vld [vmem:[%s3 + $0x60] sm:$0xf]
    %v209 = vld [vmem:[%s3 + $0x64] sm:$0xf]
    %v210 = vld [vmem:[%s3 + $0x68] sm:$0xf]
    %v211 = vld [vmem:[%s3 + $0x6c] sm:$0xf]
    %v212 = vld [vmem:[%s3 + $0x70] sm:$0xf]
    %v213 = vld [vmem:[%s3 + $0x74] sm:$0xf]
    %v214 = vld [vmem:[%s3 + $0x78] sm:$0xf]
    %v215 = vld [vmem:[%s3 + $0x7c] sm:$0xf]
    %v248 = vunpack.c.l.b16 %v184
    %v249 = vunpack.c.l.b16 %v185
    %v250 = vunpack.c.l.b16 %v186
    %v251 = vunpack.c.l.b16 %v187
    %v252 = vunpack.c.l.b16 %v188
    %v253 = vunpack.c.l.b16 %v189
    %v254 = vunpack.c.l.b16 %v190
    %v255 = vunpack.c.l.b16 %v191
    %v256 = vunpack.c.l.b16 %v192
    %v257 = vunpack.c.l.b16 %v193
    %v258 = vunpack.c.l.b16 %v194
    %v259 = vunpack.c.l.b16 %v195
    %v260 = vunpack.c.l.b16 %v196
    %v261 = vunpack.c.l.b16 %v197
    %v262 = vunpack.c.l.b16 %v198
    %v263 = vunpack.c.l.b16 %v199
    %v264 = vunpack.c.l.b16 %v200
    %v265 = vunpack.c.l.b16 %v201
    %v266 = vunpack.c.l.b16 %v202
    %v267 = vunpack.c.l.b16 %v203
    %v268 = vunpack.c.l.b16 %v204
    %v269 = vunpack.c.l.b16 %v205
    %v270 = vunpack.c.l.b16 %v206
    %v271 = vunpack.c.l.b16 %v207
    %v272 = vunpack.c.l.b16 %v208
    %v273 = vunpack.c.l.b16 %v209
    %v274 = vunpack.c.l.b16 %v210
    %v275 = vunpack.c.l.b16 %v211
    %v276 = vunpack.c.l.b16 %v212
    %v277 = vunpack.c.l.b16 %v213
    %v278 = vunpack.c.l.b16 %v214
    %v279 = vunpack.c.l.b16 %v215
    %v280 = vpack.c.b16 %v249, %v248
    %v281 = vpack.c.b16 %v251, %v250
    %v282 = vpack.c.b16 %v253, %v252
    %v283 = vpack.c.b16 %v255, %v254
    %v284 = vpack.c.b16 %v257, %v256
    %v285 = vpack.c.b16 %v259, %v258
    %v286 = vpack.c.b16 %v261, %v260
    %v287 = vpack.c.b16 %v263, %v262
    %v288 = vpack.c.b16 %v265, %v264
    %v289 = vpack.c.b16 %v267, %v266
    %v290 = vpack.c.b16 %v269, %v268
    %v291 = vpack.c.b16 %v271, %v270
    %v292 = vpack.c.b16 %v273, %v272
    %v293 = vpack.c.b16 %v275, %v274
    %v294 = vpack.c.b16 %v277, %v276
    %v295 = vpack.c.b16 %v279, %v278
    %312 = vmatprep.subr.bf16.mxu0 0
    %313 = vmatpush1.bf16.msra.mxu0 %v280
    %314 = vmatprep.subr.bf16.mxu0 0
    %315 = vmatpush1.bf16.msra.mxu0 %v281
    %316 = vmatprep.subr.bf16.mxu0 0
    %317 = vmatpush1.bf16.msra.mxu0 %v282
    %318 = vmatprep.subr.bf16.mxu0 0
    %319 = vmatpush1.bf16.msra.mxu0 %v283
    %320 = vmatprep.subr.bf16.mxu0 0
    %321 = vmatpush1.bf16.msra.mxu0 %v284
    %322 = vmatprep.subr.bf16.mxu0 0
    %323 = vmatpush1.bf16.msra.mxu0 %v285
    %324 = vmatprep.subr.bf16.mxu0 0
    %325 = vmatpush1.bf16.msra.mxu0 %v286
    %326 = vmatprep.subr.bf16.mxu0 0
    %327 = vmatpush1.bf16.msra.mxu0 %v287
    %328 = vmatprep.subr.bf16.mxu0 0
    %329 = vmatpush1.bf16.msra.mxu0 %v288
    %330 = vmatprep.subr.bf16.mxu0 0
    %331 = vmatpush1.bf16.msra.mxu0 %v289
    %332 = vmatprep.subr.bf16.mxu0 0
    %333 = vmatpush1.bf16.msra.mxu0 %v290
    %334 = vmatprep.subr.bf16.mxu0 0
    %335 = vmatpush1.bf16.msra.mxu0 %v291
    %336 = vmatprep.subr.bf16.mxu0 0
    %337 = vmatpush1.bf16.msra.mxu0 %v292
    %338 = vmatprep.subr.bf16.mxu0 0
    %339 = vmatpush1.bf16.msra.mxu0 %v293
    %340 = vmatprep.subr.bf16.mxu0 0
    %341 = vmatpush1.bf16.msra.mxu0 %v294
    %342 = vmatprep.subr.bf16.mxu0 0
    %343 = vmatpush1.bf16.msra.mxu0 %v295
    %344 = vmatprep.mubr.bf16.mxu0 %v183
    %345 = vmatmul.mubr.bf16.gmra.mrb[0].mxu0 %v182
    %v346 = vpop.f32.mrb[0].mxu0
    %v347 = vadd.f32 0.0, %v346
    %v348 = vpop.f32.mrb[0].mxu0
    %v349 = vpop.f32.mrb[0].mxu0
    %v350 = vadd.f32 0.0, %v349
    %v351 = vpop.f32.mrb[0].mxu0
    %352 = vdwg.mxu0
    %v353 = vadd.f32 %v180, %v347
    %v354 = vadd.f32 %v181, %v350
    %355 = vst.msk [vmem:[#allocation3] sm:$0xff] %vm129, %v353
    %356 = vst.msk [vmem:[#allocation3 + $0x8] sm:$0xff] %vm129, %v354
    // Predicated region
    $region42: #{encoder_layer.1} parent=1 // pred_check
      %p357 = pneg %p34
    $region43: #{encoder_layer.1} parent=1 // pred_check_branch
      %359 = sbr.rel (%p357) target = $region45
    $region44: #{encoder_layer.1} parent=1 // pred_region
      %v360 = vld [vmem:[#allocation3] sm:$0xff]
      %v361 = vld [vmem:[#allocation3 + $0x8] sm:$0xff]
      %v362 = vld [vmem:[%s4] sm:$0x1]
      %v364 = vlaneseq
      %v365 = vshrl.u32 %v364, 7
      %v366 = vsub.s32 0, %v365
      %v367 = vrot.slane %v362, %v366
      %v369 = vadd.f32 %v360, %v367
      %v370 = vadd.f32 %v361, %v367
      %v371 = vld [vmem:[#allocation2] sm:$0xff]
      %v372 = vld [vmem:[#allocation2 + $0x8] sm:$0xff]
      %v373 = vadd.f32 %v371, %v369
      %v374 = vadd.f32 %v372, %v370
      %v375 = vld [vmem:[%s7] sm:$0x1]
      %v376 = vld [vmem:[%s8] sm:$0x1]
      %v377 = vsel %vm129, %v373, 0.0
      %378 = vadd.xlane.f32.xlu0 %v377
      %v379 = vpop.xlane.xlu0 %378
      %v380 = vsel %vm129, %v374, 0.0
      %381 = vadd.xlane.f32.xlu0 %v380
      %v382 = vpop.xlane.xlu0 %381
      %v383 = vrcp.pop 32.0
      %v384 = vmul.f32 %v379, %v383
      %v385 = vmul.f32 %v382, %v383
      %v386 = vsub.f32 %v373, %v384
      %v387 = vsub.f32 %v374, %v385
      %v388 = vmul.f32 %v386, %v386
      %v389 = vmul.f32 %v387, %v387
      %v390 = vsel %vm129, %v388, 0.0
      %391 = vadd.xlane.f32.xlu0 %v390
      %v392 = vpop.xlane.xlu0 %391
      %v393 = vsel %vm129, %v389, 0.0
      %394 = vadd.xlane.f32.xlu0 %v393
      %v395 = vpop.xlane.xlu0 %394
      %v396 = vmul.f32 %v392, %v383
      %v397 = vmul.f32 %v395, %v383
      %v398 = vadd.f32 %v396, 1e-05
      %v399 = vadd.f32 %v397, 1e-05
      %v400 = vrsqrt.pop %v398
      %v401 = vrsqrt.pop %v399
      %v402 = vmul.f32 %v386, %v400
      %v403 = vmul.f32 %v387, %v401
      %v405 = vlaneseq
      %v406 = vshrl.u32 %v405, 7
      %v407 = vsub.s32 0, %v406
      %v408 = vrot.slane %v375, %v407
      %v410 = vmul.f32 %v402, %v408
      %v411 = vmul.f32 %v403, %v408
      %v413 = vlaneseq
      %v414 = vshrl.u32 %v413, 7
      %v415 = vsub.s32 0, %v414
      %v416 = vrot.slane %v376, %v415
      %v418 = vadd.f32 %v410, %v416
      %v419 = vadd.f32 %v411, %v416
      %420 = vst.msk [vmem:[#allocation4] sm:$0xff] %vm129, %v418
      %421 = vst.msk [vmem:[#allocation4 + $0x8] sm:$0xff] %vm129, %v419
    $region45: #{encoder_layer.1} parent=1 // pred_fallthru
      _
    // Predicated region
    $region46: #{encoder_layer.1} parent=1 // pred_check
      _
    $region47: #{encoder_layer.1} parent=1 // pred_check_branch
      %423 = sbr.rel (0) target = $region49
    $region48: #{encoder_layer.1} parent=1 // pred_region
      %s425 = ssub.s32 256, 256
      %426 = vsyncadd [#allocation5], %s425
      %s427 = sshll.u32 [#allocation4], 4
      %s428 = int_to_ptr.vmem [resolvable:$true] %s427
      %433 = dma.vmem_to_hbm [thread:$0]  %s428, 256, %s9, [#allocation5], 128, 128, 8
    $region49: #{encoder_layer.1} parent=1 // pred_fallthru
      _
    // Predicated region
    $region50: #{encoder_layer.1} parent=1 // pred_check
      _
    $region51: #{encoder_layer.1} parent=1 // pred_check_branch
      %435 = sbr.rel (0) target = $region53
    $region52: #{encoder_layer.1} parent=1 // pred_region
      %436 = dma.done [#allocation5], 256
    $region53: #{encoder_layer.1} parent=1 // pred_fallthru
      _
    %437 = vsyncpa [#allocation5], 1

</llo_original>
